<compile_context>
chip_gen: v5e
topology: v5e:2x2
jax: 0.10.0
libtpu: 0.0.40
codegen_flags: <defaults>
</compile_context>

<pallas_src>
import jax
import jax.numpy as jnp
from jax.experimental import pallas as pl
from jax.experimental.pallas import tpu as pltpu
import numpy as np

HIDDEN = 100            # layer_size in the PyTorch module
HP = 128                # hidden padded to one full lane tile
CHANNELS = 20
MXU_DTYPE = jnp.bfloat16   # MXU operand dtype; accumulation stays f32


def _round_up(x, m):
    return (x + m - 1) // m * m


# ----------------------------------------------------------------------------
# Kernel: full forward pass for one batch tile, everything resident in VMEM.
# ----------------------------------------------------------------------------
def net2_kernel(priv_ref, pub_ref,
                m1_ref, bc1_ref, m2_ref, bc2_ref,
                e1_ref, e2_ref, w2_ref, b0_ref,
                wh_ref, bh_ref,
                w4_ref, b4_ref,
                out_ref):
    f32 = jnp.float32
    mxu = m1_ref.dtype                             # bf16 (perf) or f32 (check)
    priv = priv_ref[...].astype(f32)               # (TB, d_pri)
    pub = pub_ref[...].astype(f32)                 # (TB, d_pub)

    # ---- "right" branch: Conv1d(1,20,k=2,pad=1)+ReLU -> Conv1d(20,1,k=2)+ReLU,
    #      folded host-side into matrices M1 (d_pub, F1P) and M2 (F1P, d_pub).
    h1 = jnp.dot(pub.astype(mxu), m1_ref[...],
                 preferred_element_type=f32)                       # (TB, F1P)
    h1 = jnp.maximum(h1 + bc1_ref[...], 0.0)
    h2 = jnp.dot(h1.astype(mxu), m2_ref[...],
                 preferred_element_type=f32)                       # (TB, d_pub)
    y = jnp.maximum(h2 + bc2_ref[...], 0.0) + pub                  # (TB, d_pub)

    # ---- Bilinear(d_pri, d_pub, 100) as lane-dense outer product + one K=KP
    #      matmul.  E1/E2 are 0/1 expansion matrices (built host-side) so the
    #      (TB, KP) features come straight off the MXU, lane-contiguous:
    #        priv_rep[b, i*d_pub+j] = priv[b, i]
    #        y_tile  [b, i*d_pub+j] = y   [b, j]
    priv_rep = jnp.dot(priv.astype(mxu), e1_ref[...],
                       preferred_element_type=f32)                 # (TB, KP)
    y_tile = jnp.dot(y.astype(mxu), e2_ref[...],
                     preferred_element_type=f32)                   # (TB, KP)
    feat = (priv_rep * y_tile).astype(mxu)                         # (TB, KP)
    h = jnp.maximum(jnp.dot(feat, w2_ref[...],
                            preferred_element_type=f32) + b0_ref[...], 0.0)

    # ---- 3 x (Linear(100,100) padded to 128 + ReLU); weights packed (3,HP,HP)
    for l in range(3):
        h = jnp.maximum(
            jnp.dot(h.astype(mxu), wh_ref[l],
                    preferred_element_type=f32) + bh_ref[l], 0.0)

    # ---- Head: Linear(100,1) + Tanh via VPU multiply + lane reduction
    #      (avoids an N=1 MXU push; padded lanes of w4 are zero).
    s = jnp.sum(h * w4_ref[...], axis=-1, keepdims=True) + b4_ref[...]
    out_ref[...] = jnp.tanh(s).astype(out_ref.dtype)               # (TB, 1)


# ----------------------------------------------------------------------------
# Host-side parameter preprocessing (PyTorch layout -> kernel layout, padded).
# ----------------------------------------------------------------------------
def preprocess_params(params, d_pri, d_pub, mxu_dtype=MXU_DTYPE):
    c1_w = np.asarray(params["c1_w"], np.float32)   # (C, 1, 2)
    c1_b = np.asarray(params["c1_b"], np.float32)   # (C,)
    c2_w = np.asarray(params["c2_w"], np.float32)   # (1, C, 2)
    c2_b = np.asarray(params["c2_b"], np.float32)   # (1,)
    bl_w = np.asarray(params["bl_w"], np.float32)   # (H, d_pri, d_pub)
    bl_b = np.asarray(params["bl_b"], np.float32)   # (H,)

    C = c1_w.shape[0]
    L1 = d_pub + 1                  # length after conv1 (padding=1, k=2)
    F1 = C * L1
    F1P = _round_up(F1, 128)        # lane-aligned flattened conv1 feature dim

    # Conv1 as a matmul: h1[b, c*L1+t] = sum_j pub[b,j]*M1[j, c*L1+t] + bc1[c*L1+t]
    M1 = np.zeros((d_pub, F1P), np.float32)
    bc1 = np.zeros((1, F1P), np.float32)
    for c in range(C):
        for t in range(L1):
            col = c * L1 + t
            bc1[0, col] = c1_b[c]
            if 1 <= t <= d_pub:            # pad[t]   = pub[t-1]
                M1[t - 1, col] += c1_w[c, 0, 0]
            if t <= d_pub - 1:             # pad[t+1] = pub[t]
                M1[t, col] += c1_w[c, 0, 1]

    # Conv2 as a matmul over the flattened (c, t) axis.
    M2 = np.zeros((F1P, d_pub), np.float32)
    for t in range(d_pub):
        for c in range(C):
            M2[c * L1 + t, t] += c2_w[0, c, 0]
            M2[c * L1 + t + 1, t] += c2_w[0, c, 1]
    bc2 = np.full((1, d_pub), float(c2_b[0]), np.float32)

    # Bilinear -> outer-product form.
    #   W2[i*d_pub + j, h] = bl_w[h, i, j]   (rows padded to KP, cols to HP)
    #   E1[i, i*d_pub + j] = 1, E2[j, i*d_pub + j] = 1   (0/1 expand matrices)
    KP = _round_up(d_pri * d_pub, 128)
    E1 = np.zeros((d_pri, KP), np.float32)
    E2 = np.zeros((d_pub, KP), np.float32)
    for i in range(d_pri):
        for j in range(d_pub):
            col = i * d_pub + j
            E1[i, col] = 1.0
            E2[j, col] = 1.0
    W2 = np.zeros((KP, HP), np.float32)
    W2[:d_pri * d_pub, :HIDDEN] = np.transpose(bl_w, (1, 2, 0)).reshape(
        d_pri * d_pub, HIDDEN)
    b0 = np.zeros((1, HP), np.float32)
    b0[0, :HIDDEN] = bl_b

    # Hidden linears packed into one (3, HP, HP) tensor, stored (in, out).
    wh = np.zeros((3, HP, HP), np.float32)
    bh = np.zeros((3, 1, HP), np.float32)
    for l, name in enumerate(("l1", "l2", "l3")):
        wh[l, :HIDDEN, :HIDDEN] = np.asarray(params[name + "_w"], np.float32).T
        bh[l, 0, :HIDDEN] = np.asarray(params[name + "_b"], np.float32)

    w4 = np.zeros((1, HP), np.float32)
    w4[0, :HIDDEN] = np.asarray(params["l4_w"], np.float32)[0]
    b4 = np.asarray(params["l4_b"], np.float32).reshape(1, 1)

    mxu = mxu_dtype
    return {
        "m1": jnp.asarray(M1, mxu), "bc1": jnp.asarray(bc1, jnp.float32),
        "m2": jnp.asarray(M2, mxu), "bc2": jnp.asarray(bc2, jnp.float32),
        "e1": jnp.asarray(E1, mxu), "e2": jnp.asarray(E2, mxu),
        "w2": jnp.asarray(W2, mxu), "b0": jnp.asarray(b0, jnp.float32),
        "wh": jnp.asarray(wh, mxu), "bh": jnp.asarray(bh, jnp.float32),
        "w4": jnp.asarray(w4, jnp.float32), "b4": jnp.asarray(b4, jnp.float32),
    }


# ----------------------------------------------------------------------------
# Wrapper: batch grid, resident weights, "parallel" batch axis.
# ----------------------------------------------------------------------------
def _pick_tile_b(B, requested):
    """Multiple of 8; multiple of 256 when large (full MXU M passes); always
    >= 2 grid steps when B > 8 so both v7x TensorCores get work."""
    requested = max(8, int(requested))
    if B <= 8:
        return 8
    cap = _round_up((B + 1) // 2, 8)          # at least two grid steps
    t = min(_round_up(requested, 8), cap)
    if t >= 256:
        t = (t // 256) * 256
    return max(8, t)


def net2_forward(priv, pub, kparams, *, tile_b=1024):
    B, d_pri = priv.shape
    d_pub = pub.shape[1]
    F1P = kparams["m1"].shape[1]
    KP = kparams["w2"].shape[0]

    tb = _pick_tile_b(B, tile_b)
    Bp = _round_up(B, tb)
    if Bp != B:
        priv = jnp.pad(priv, ((0, Bp - B), (0, 0)))
        pub = jnp.pad(pub, ((0, Bp - B), (0, 0)))
    nb = Bp // tb

    row_map = lambda i: (i, 0)
    const2 = lambda i: (0, 0)
    const3 = lambda i: (0, 0, 0)

    in_specs = [
        pl.BlockSpec((tb, d_pri), row_map),                # priv
        pl.BlockSpec((tb, d_pub), row_map),                # pub
        pl.BlockSpec((d_pub, F1P), const2),                # M1  (conv1)
        pl.BlockSpec((1, F1P), const2),                    # bc1
        pl.BlockSpec((F1P, d_pub), const2),                # M2  (conv2)
        pl.BlockSpec((1, d_pub), const2),                  # bc2
        pl.BlockSpec((d_pri, KP), const2),                 # E1 (priv expand)
        pl.BlockSpec((d_pub, KP), const2),                 # E2 (y expand)
        pl.BlockSpec((KP, HP), const2),                    # W2 (bilinear, K=KP)
        pl.BlockSpec((1, HP), const2),                     # b0
        pl.BlockSpec((3, HP, HP), const3),                 # packed hidden weights
        pl.BlockSpec((3, 1, HP), const3),                  # packed hidden biases
        pl.BlockSpec((1, HP), const2),                     # w4 (head row)
        pl.BlockSpec((1, 1), const2),                      # b4
    ]
    out_spec = pl.BlockSpec((tb, 1), row_map)

    kp = kparams
    out = pl.pallas_call(
        net2_kernel,
        out_shape=jax.ShapeDtypeStruct((Bp, 1), jnp.float32),
        grid_spec=pltpu.PrefetchScalarGridSpec(
            num_scalar_prefetch=0,
            grid=(nb,),
            in_specs=in_specs,
            out_specs=out_spec,
        ),
        compiler_params=pltpu.CompilerParams(
            dimension_semantics=("parallel",)),
    )(priv, pub, kp["m1"], kp["bc1"], kp["m2"], kp["bc2"],
      kp["e1"], kp["e2"], kp["w2"], kp["b0"],
      kp["wh"], kp["bh"], kp["w4"], kp["b4"])
    return out[:B]


# ----------------------------------------------------------------------------
# Deterministic PyTorch-layout params + pure-JAX reference for correctness.
# ----------------------------------------------------------------------------
def make_params(key, d_pri, d_pub, hidden=HIDDEN, channels=CHANNELS):
    ks = jax.random.split(key, 14)

    def u(k, shape, fan_in):
        b = 1.0 / np.sqrt(fan_in)
        return jax.random.uniform(k, shape, jnp.float32, -b, b)

    return {
        "c1_w": u(ks[0], (channels, 1, 2), 1 * 2),
        "c1_b": u(ks[1], (channels,), 1 * 2),
        "c2_w": u(ks[2], (1, channels, 2), channels * 2),
        "c2_b": u(ks[3], (1,), channels * 2),
        "bl_w": u(ks[4], (hidden, d_pri, d_pub), d_pri),
        "bl_b": u(ks[5], (hidden,), d_pri),
        "l1_w": u(ks[6], (hidden, hidden), hidden),
        "l1_b": u(ks[7], (hidden,), hidden),
        "l2_w": u(ks[8], (hidden, hidden), hidden),
        "l2_b": u(ks[9], (hidden,), hidden),
        "l3_w": u(ks[10], (hidden, hidden), hidden),
        "l3_b": u(ks[11], (hidden,), hidden),
        "l4_w": u(ks[12], (1, hidden), hidden),
        "l4_b": u(ks[13], (1,), hidden),
    }


def net2_forward_ref(priv, pub, params):
    relu = jax.nn.relu
    prec = jax.lax.Precision.HIGHEST
    dn = ("NCH", "OIH", "NCH")

    x = pub[:, None, :]                                     # (B, 1, d_pub)
    h = jax.lax.conv_general_dilated(
        x, params["c1_w"], window_strides=(1,), padding=[(1, 1)],
        dimension_numbers=dn, precision=prec)
    h = relu(h + params["c1_b"][None, :, None])
    h = jax.lax.conv_general_dilated(
        h, params["c2_w"], window_strides=(1,), padding=[(0, 0)],
        dimension_numbers=dn, precision=prec)
    h = relu(h + params["c2_b"][None, :, None])
    y = h[:, 0, :] + pub                                    # (B, d_pub)

    mixed = jnp.einsum("bi,hij,bj->bh", priv, params["bl_w"], y,
                       precision=prec) + params["bl_b"]
    h = relu(mixed)
    for name in ("l1", "l2", "l3"):
        h = relu(jnp.dot(h, params[name + "_w"].T, precision=prec)
                 + params[name + "_b"])
    return jnp.tanh(jnp.dot(h, params["l4_w"].T, precision=prec)
                    + params["l4_b"])


if __name__ == "__main__":
    B, d_pri, d_pub = 32, 16, 8

    key = jax.random.PRNGKey(0)
    kp_key, k1, k2 = jax.random.split(key, 3)
    params = make_params(kp_key, d_pri, d_pub)
    priv = jax.random.normal(k1, (B, d_pri), jnp.float32)
    pub = jax.random.normal(k2, (B, d_pub), jnp.float32)

    ref = jax.block_until_ready(net2_forward_ref(priv, pub, params))

    # f32 MXU path: tight structural check (conv fold, bilinear repack, padding).
    kp_f32 = preprocess_params(params, d_pri, d_pub, mxu_dtype=jnp.float32)
    out_f32 = jax.block_until_ready(net2_forward(priv, pub, kp_f32, tile_b=1024))
    assert out_f32.shape == (B, 1)
    np.testing.assert_allclose(np.asarray(out_f32), np.asarray(ref),
                               rtol=2e-4, atol=1e-4)

    # bf16 MXU path (performance default): looser numerical tolerance.
    kp_bf16 = preprocess_params(params, d_pri, d_pub, mxu_dtype=jnp.bfloat16)
    out_bf16 = jax.block_until_ready(net2_forward(priv, pub, kp_bf16, tile_b=1024))
    assert out_bf16.shape == (B, 1)
    np.testing.assert_allclose(np.asarray(out_bf16), np.asarray(ref),
                               rtol=7.5e-2, atol=7.5e-2)

    print("KERNEL_OK")
</pallas_src>

<mosaic_0001>
module attributes {stable_mosaic.version = 11 : i64} {
  func.func @net2_kernel(%arg0: i32, %arg1: memref<16x16xf32, #tpu.memory_space<vmem>>, %arg2: memref<16x8xf32, #tpu.memory_space<vmem>>, %arg3: memref<8x256xf32, #tpu.memory_space<vmem>>, %arg4: memref<1x256xf32, #tpu.memory_space<vmem>>, %arg5: memref<256x8xf32, #tpu.memory_space<vmem>>, %arg6: memref<1x8xf32, #tpu.memory_space<vmem>>, %arg7: memref<16x128xf32, #tpu.memory_space<vmem>>, %arg8: memref<8x128xf32, #tpu.memory_space<vmem>>, %arg9: memref<128x128xf32, #tpu.memory_space<vmem>>, %arg10: memref<1x128xf32, #tpu.memory_space<vmem>>, %arg11: memref<3x128x128xf32, #tpu.memory_space<vmem>>, %arg12: memref<3x1x128xf32, #tpu.memory_space<vmem>>, %arg13: memref<1x128xf32, #tpu.memory_space<vmem>>, %arg14: memref<1x1xf32, #tpu.memory_space<vmem>>, %arg15: memref<16x1xf32, #tpu.memory_space<vmem>>) attributes {dimension_semantics = [#tpu.dimension_semantics<parallel>], iteration_bounds = array<i64: 2>, scalar_prefetch = 0 : i64, scratch_operands = 0 : i64, tpu.core_type = #tpu.core_type<tc>, window_params = [{transform_indices = @transform_0, window_bounds = array<i64: 16, 16>}, {transform_indices = @transform_1, window_bounds = array<i64: 16, 8>}, {pipeline_mode = #tpu.pipeline_mode<synchronous>, transform_indices = @transform_2, window_bounds = array<i64: 8, 256>}, {pipeline_mode = #tpu.pipeline_mode<synchronous>, transform_indices = @transform_3, window_bounds = array<i64: 1, 256>}, {pipeline_mode = #tpu.pipeline_mode<synchronous>, transform_indices = @transform_4, window_bounds = array<i64: 256, 8>}, {pipeline_mode = #tpu.pipeline_mode<synchronous>, transform_indices = @transform_5, window_bounds = array<i64: 1, 8>}, {pipeline_mode = #tpu.pipeline_mode<synchronous>, transform_indices = @transform_6, window_bounds = array<i64: 16, 128>}, {pipeline_mode = #tpu.pipeline_mode<synchronous>, transform_indices = @transform_7, window_bounds = array<i64: 8, 128>}, {pipeline_mode = #tpu.pipeline_mode<synchronous>, transform_indices = @transform_8, window_bounds = array<i64: 128, 128>}, {pipeline_mode = #tpu.pipeline_mode<synchronous>, transform_indices = @transform_9, window_bounds = array<i64: 1, 128>}, {pipeline_mode = #tpu.pipeline_mode<synchronous>, transform_indices = @transform_10, window_bounds = array<i64: 3, 128, 128>}, {pipeline_mode = #tpu.pipeline_mode<synchronous>, transform_indices = @transform_11, window_bounds = array<i64: 3, 1, 128>}, {pipeline_mode = #tpu.pipeline_mode<synchronous>, transform_indices = @transform_12, window_bounds = array<i64: 1, 128>}, {pipeline_mode = #tpu.pipeline_mode<synchronous>, transform_indices = @transform_13, window_bounds = array<i64: 1, 1>}, {transform_indices = @transform_14, window_bounds = array<i64: 16, 1>}]} {
    %c0 = arith.constant 0 : index
    %c0_0 = arith.constant 0 : index
    %0 = vector.load %arg1[%c0, %c0_0] : memref<16x16xf32, #tpu.memory_space<vmem>>, vector<16x16xf32>
    %c0_1 = arith.constant 0 : index
    %c0_2 = arith.constant 0 : index
    %1 = vector.load %arg2[%c0_1, %c0_2] : memref<16x8xf32, #tpu.memory_space<vmem>>, vector<16x8xf32>
    %c0_3 = arith.constant 0 : index
    %c0_4 = arith.constant 0 : index
    %2 = vector.load %arg3[%c0_3, %c0_4] : memref<8x256xf32, #tpu.memory_space<vmem>>, vector<8x256xf32>
    %cst = arith.constant dense<0.000000e+00> : vector<16x256xf32>
    %3 = tpu.matmul %1, %2, %cst {dimension_numbers = #tpu.dot_dimension_numbers<[1], [0], [0], [1], [0, 0, 1, 1], [], []>} : vector<16x8xf32>, vector<8x256xf32>, vector<16x256xf32> -> vector<16x256xf32>
    %c0_5 = arith.constant 0 : index
    %c0_6 = arith.constant 0 : index
    %4 = vector.load %arg4[%c0_5, %c0_6] : memref<1x256xf32, #tpu.memory_space<vmem>>, vector<1x256xf32>
    %5 = vector.broadcast %4 : vector<1x256xf32> to vector<16x256xf32>
    %6 = arith.addf %3, %5 : vector<16x256xf32>
    %cst_7 = arith.constant 0.000000e+00 : f32
    %7 = vector.broadcast %cst_7 : f32 to vector<16x256xf32>
    %8 = arith.maximumf %6, %7 : vector<16x256xf32>
    %c0_8 = arith.constant 0 : index
    %c0_9 = arith.constant 0 : index
    %9 = vector.load %arg5[%c0_8, %c0_9] : memref<256x8xf32, #tpu.memory_space<vmem>>, vector<256x8xf32>
    %cst_10 = arith.constant dense<0.000000e+00> : vector<16x8xf32>
    %10 = tpu.matmul %8, %9, %cst_10 {dimension_numbers = #tpu.dot_dimension_numbers<[1], [0], [0], [1], [0, 0, 1, 1], [], []>} : vector<16x256xf32>, vector<256x8xf32>, vector<16x8xf32> -> vector<16x8xf32>
    %c0_11 = arith.constant 0 : index
    %c0_12 = arith.constant 0 : index
    %11 = vector.load %arg6[%c0_11, %c0_12] : memref<1x8xf32, #tpu.memory_space<vmem>>, vector<1x8xf32>
    %12 = vector.broadcast %11 : vector<1x8xf32> to vector<16x8xf32>
    %13 = arith.addf %10, %12 : vector<16x8xf32>
    %cst_13 = arith.constant 0.000000e+00 : f32
    %14 = vector.broadcast %cst_13 : f32 to vector<16x8xf32>
    %15 = arith.maximumf %13, %14 : vector<16x8xf32>
    %16 = arith.addf %15, %1 : vector<16x8xf32>
    %c0_14 = arith.constant 0 : index
    %c0_15 = arith.constant 0 : index
    %17 = vector.load %arg7[%c0_14, %c0_15] : memref<16x128xf32, #tpu.memory_space<vmem>>, vector<16x128xf32>
    %cst_16 = arith.constant dense<0.000000e+00> : vector<16x128xf32>
    %18 = tpu.matmul %0, %17, %cst_16 {dimension_numbers = #tpu.dot_dimension_numbers<[1], [0], [0], [1], [0, 0, 1, 1], [], []>} : vector<16x16xf32>, vector<16x128xf32>, vector<16x128xf32> -> vector<16x128xf32>
    %c0_17 = arith.constant 0 : index
    %c0_18 = arith.constant 0 : index
    %19 = vector.load %arg8[%c0_17, %c0_18] : memref<8x128xf32, #tpu.memory_space<vmem>>, vector<8x128xf32>
    %cst_19 = arith.constant dense<0.000000e+00> : vector<16x128xf32>
    %20 = tpu.matmul %16, %19, %cst_19 {dimension_numbers = #tpu.dot_dimension_numbers<[1], [0], [0], [1], [0, 0, 1, 1], [], []>} : vector<16x8xf32>, vector<8x128xf32>, vector<16x128xf32> -> vector<16x128xf32>
    %21 = arith.mulf %18, %20 : vector<16x128xf32>
    %c0_20 = arith.constant 0 : index
    %c0_21 = arith.constant 0 : index
    %22 = vector.load %arg9[%c0_20, %c0_21] : memref<128x128xf32, #tpu.memory_space<vmem>>, vector<128x128xf32>
    %cst_22 = arith.constant dense<0.000000e+00> : vector<16x128xf32>
    %23 = tpu.matmul %21, %22, %cst_22 {dimension_numbers = #tpu.dot_dimension_numbers<[1], [0], [0], [1], [0, 0, 1, 1], [], []>} : vector<16x128xf32>, vector<128x128xf32>, vector<16x128xf32> -> vector<16x128xf32>
    %c0_23 = arith.constant 0 : index
    %c0_24 = arith.constant 0 : index
    %24 = vector.load %arg10[%c0_23, %c0_24] : memref<1x128xf32, #tpu.memory_space<vmem>>, vector<1x128xf32>
    %25 = vector.broadcast %24 : vector<1x128xf32> to vector<16x128xf32>
    %26 = arith.addf %23, %25 : vector<16x128xf32>
    %cst_25 = arith.constant 0.000000e+00 : f32
    %27 = vector.broadcast %cst_25 : f32 to vector<16x128xf32>
    %28 = arith.maximumf %26, %27 : vector<16x128xf32>
    %c0_26 = arith.constant 0 : index
    %c0_27 = arith.constant 0 : index
    %c0_28 = arith.constant 0 : index
    %29 = vector.load %arg11[%c0_26, %c0_27, %c0_28] : memref<3x128x128xf32, #tpu.memory_space<vmem>>, vector<1x128x128xf32>
    %30 = vector.shape_cast %29 : vector<1x128x128xf32> to vector<128x128xf32>
    %cst_29 = arith.constant dense<0.000000e+00> : vector<16x128xf32>
    %31 = tpu.matmul %28, %30, %cst_29 {dimension_numbers = #tpu.dot_dimension_numbers<[1], [0], [0], [1], [0, 0, 1, 1], [], []>} : vector<16x128xf32>, vector<128x128xf32>, vector<16x128xf32> -> vector<16x128xf32>
    %c0_30 = arith.constant 0 : index
    %c0_31 = arith.constant 0 : index
    %c0_32 = arith.constant 0 : index
    %32 = vector.load %arg12[%c0_30, %c0_31, %c0_32] : memref<3x1x128xf32, #tpu.memory_space<vmem>>, vector<1x1x128xf32>
    %33 = vector.shape_cast %32 : vector<1x1x128xf32> to vector<1x128xf32>
    %34 = vector.broadcast %33 : vector<1x128xf32> to vector<16x128xf32>
    %35 = arith.addf %31, %34 : vector<16x128xf32>
    %cst_33 = arith.constant 0.000000e+00 : f32
    %36 = vector.broadcast %cst_33 : f32 to vector<16x128xf32>
    %37 = arith.maximumf %35, %36 : vector<16x128xf32>
    %c1 = arith.constant 1 : index
    %c0_34 = arith.constant 0 : index
    %c0_35 = arith.constant 0 : index
    %38 = vector.load %arg11[%c1, %c0_34, %c0_35] : memref<3x128x128xf32, #tpu.memory_space<vmem>>, vector<1x128x128xf32>
    %39 = vector.shape_cast %38 : vector<1x128x128xf32> to vector<128x128xf32>
    %cst_36 = arith.constant dense<0.000000e+00> : vector<16x128xf32>
    %40 = tpu.matmul %37, %39, %cst_36 {dimension_numbers = #tpu.dot_dimension_numbers<[1], [0], [0], [1], [0, 0, 1, 1], [], []>} : vector<16x128xf32>, vector<128x128xf32>, vector<16x128xf32> -> vector<16x128xf32>
    %c1_37 = arith.constant 1 : index
    %c0_38 = arith.constant 0 : index
    %c0_39 = arith.constant 0 : index
    %41 = vector.load %arg12[%c1_37, %c0_38, %c0_39] : memref<3x1x128xf32, #tpu.memory_space<vmem>>, vector<1x1x128xf32>
    %42 = vector.shape_cast %41 : vector<1x1x128xf32> to vector<1x128xf32>
    %43 = vector.broadcast %42 : vector<1x128xf32> to vector<16x128xf32>
    %44 = arith.addf %40, %43 : vector<16x128xf32>
    %cst_40 = arith.constant 0.000000e+00 : f32
    %45 = vector.broadcast %cst_40 : f32 to vector<16x128xf32>
    %46 = arith.maximumf %44, %45 : vector<16x128xf32>
    %c2 = arith.constant 2 : index
    %c0_41 = arith.constant 0 : index
    %c0_42 = arith.constant 0 : index
    %47 = vector.load %arg11[%c2, %c0_41, %c0_42] : memref<3x128x128xf32, #tpu.memory_space<vmem>>, vector<1x128x128xf32>
    %48 = vector.shape_cast %47 : vector<1x128x128xf32> to vector<128x128xf32>
    %cst_43 = arith.constant dense<0.000000e+00> : vector<16x128xf32>
    %49 = tpu.matmul %46, %48, %cst_43 {dimension_numbers = #tpu.dot_dimension_numbers<[1], [0], [0], [1], [0, 0, 1, 1], [], []>} : vector<16x128xf32>, vector<128x128xf32>, vector<16x128xf32> -> vector<16x128xf32>
    %c2_44 = arith.constant 2 : index
    %c0_45 = arith.constant 0 : index
    %c0_46 = arith.constant 0 : index
    %50 = vector.load %arg12[%c2_44, %c0_45, %c0_46] : memref<3x1x128xf32, #tpu.memory_space<vmem>>, vector<1x1x128xf32>
    %51 = vector.shape_cast %50 : vector<1x1x128xf32> to vector<1x128xf32>
    %52 = vector.broadcast %51 : vector<1x128xf32> to vector<16x128xf32>
    %53 = arith.addf %49, %52 : vector<16x128xf32>
    %cst_47 = arith.constant 0.000000e+00 : f32
    %54 = vector.broadcast %cst_47 : f32 to vector<16x128xf32>
    %55 = arith.maximumf %53, %54 : vector<16x128xf32>
    %c0_48 = arith.constant 0 : index
    %c0_49 = arith.constant 0 : index
    %56 = vector.load %arg13[%c0_48, %c0_49] : memref<1x128xf32, #tpu.memory_space<vmem>>, vector<1x128xf32>
    %57 = vector.broadcast %56 : vector<1x128xf32> to vector<16x128xf32>
    %58 = arith.mulf %55, %57 : vector<16x128xf32>
    %cst_50 = arith.constant dense<0.000000e+00> : vector<16xf32>
    %59 = vector.multi_reduction <add>, %58, %cst_50 [1] : vector<16x128xf32> to vector<16xf32>
    %60 = vector.shape_cast %59 : vector<16xf32> to vector<16x1xf32>
    %c0_51 = arith.constant 0 : index
    %c0_52 = arith.constant 0 : index
    %61 = vector.load %arg14[%c0_51, %c0_52] : memref<1x1xf32, #tpu.memory_space<vmem>>, vector<1x1xf32>
    %62 = vector.broadcast %61 : vector<1x1xf32> to vector<16x1xf32>
    %63 = arith.addf %60, %62 : vector<16x1xf32>
    %64 = math.tanh %63 : vector<16x1xf32>
    %c0_53 = arith.constant 0 : index
    %c0_54 = arith.constant 0 : index
    %65 = vector.load %arg15[%c0_53, %c0_54] : memref<16x1xf32, #tpu.memory_space<vmem>>, vector<16x1xf32>
    tpu.vector_store %arg15[%c0_53, %c0_54], %64 {strides = array<i32>} : memref<16x1xf32, #tpu.memory_space<vmem>>, vector<16x1xf32>,
    return
  }
  func.func @transform_0(%arg0: i32) -> (i32, i32) {
    %c0_i32 = arith.constant 0 : i32
    %c0_i32_0 = arith.constant 0 : i32
    return %arg0, %c0_i32 : i32, i32
  }
  func.func @transform_1(%arg0: i32) -> (i32, i32) {
    %c0_i32 = arith.constant 0 : i32
    %c0_i32_0 = arith.constant 0 : i32
    return %arg0, %c0_i32 : i32, i32
  }
  func.func @transform_2(%arg0: i32) -> (i32, i32) {
    %c0_i32 = arith.constant 0 : i32
    %c0_i32_0 = arith.constant 0 : i32
    %c0_i32_1 = arith.constant 0 : i32
    return %c0_i32, %c0_i32_0 : i32, i32
  }
  func.func @transform_3(%arg0: i32) -> (i32, i32) {
    %c0_i32 = arith.constant 0 : i32
    %c0_i32_0 = arith.constant 0 : i32
    %c0_i32_1 = arith.constant 0 : i32
    return %c0_i32, %c0_i32_0 : i32, i32
  }
  func.func @transform_4(%arg0: i32) -> (i32, i32) {
    %c0_i32 = arith.constant 0 : i32
    %c0_i32_0 = arith.constant 0 : i32
    %c0_i32_1 = arith.constant 0 : i32
    return %c0_i32, %c0_i32_0 : i32, i32
  }
  func.func @transform_5(%arg0: i32) -> (i32, i32) {
    %c0_i32 = arith.constant 0 : i32
    %c0_i32_0 = arith.constant 0 : i32
    %c0_i32_1 = arith.constant 0 : i32
    return %c0_i32, %c0_i32_0 : i32, i32
  }
  func.func @transform_6(%arg0: i32) -> (i32, i32) {
    %c0_i32 = arith.constant 0 : i32
    %c0_i32_0 = arith.constant 0 : i32
    %c0_i32_1 = arith.constant 0 : i32
    return %c0_i32, %c0_i32_0 : i32, i32
  }
  func.func @transform_7(%arg0: i32) -> (i32, i32) {
    %c0_i32 = arith.constant 0 : i32
    %c0_i32_0 = arith.constant 0 : i32
    %c0_i32_1 = arith.constant 0 : i32
    return %c0_i32, %c0_i32_0 : i32, i32
  }
  func.func @transform_8(%arg0: i32) -> (i32, i32) {
    %c0_i32 = arith.constant 0 : i32
    %c0_i32_0 = arith.constant 0 : i32
    %c0_i32_1 = arith.constant 0 : i32
    return %c0_i32, %c0_i32_0 : i32, i32
  }
  func.func @transform_9(%arg0: i32) -> (i32, i32) {
    %c0_i32 = arith.constant 0 : i32
    %c0_i32_0 = arith.constant 0 : i32
    %c0_i32_1 = arith.constant 0 : i32
    return %c0_i32, %c0_i32_0 : i32, i32
  }
  func.func @transform_10(%arg0: i32) -> (i32, i32, i32) {
    %c0_i32 = arith.constant 0 : i32
    %c0_i32_0 = arith.constant 0 : i32
    %c0_i32_1 = arith.constant 0 : i32
    %c0_i32_2 = arith.constant 0 : i32
    return %c0_i32, %c0_i32_0, %c0_i32_1 : i32, i32, i32
  }
  func.func @transform_11(%arg0: i32) -> (i32, i32, i32) {
    %c0_i32 = arith.constant 0 : i32
    %c0_i32_0 = arith.constant 0 : i32
    %c0_i32_1 = arith.constant 0 : i32
    %c0_i32_2 = arith.constant 0 : i32
    return %c0_i32, %c0_i32_0, %c0_i32_1 : i32, i32, i32
  }
  func.func @transform_12(%arg0: i32) -> (i32, i32) {
    %c0_i32 = arith.constant 0 : i32
    %c0_i32_0 = arith.constant 0 : i32
    %c0_i32_1 = arith.constant 0 : i32
    return %c0_i32, %c0_i32_0 : i32, i32
  }
  func.func @transform_13(%arg0: i32) -> (i32, i32) {
    %c0_i32 = arith.constant 0 : i32
    %c0_i32_0 = arith.constant 0 : i32
    %c0_i32_1 = arith.constant 0 : i32
    return %c0_i32, %c0_i32_0 : i32, i32
  }
  func.func @transform_14(%arg0: i32) -> (i32, i32) {
    %c0_i32 = arith.constant 0 : i32
    %c0_i32_0 = arith.constant 0 : i32
    return %arg0, %c0_i32 : i32, i32
  }
}

</mosaic_0001>

<llo_original>
// kernel: tpu_custom_call.1
$region0: #{tpu_custom_call.1}
  #allocation0 [shape = 'u32[]', space=smem, size = 0x4, offset = 0x4, fixed_abs, tag = 'smem constant byte address 0x4 - core index']
  #allocation1 [shape = 'u32[72,128]{1,0:T(1,128)}', space=vmem, size = 0x9000, scoped, tag = 'internal scratch']
  #allocation2 [shape = 'f32[1,1]{1,0:T(1,128)S(1)}', space=vmem, size = 0x200, scoped, tag = 'scoped memory for tpu_custom_call.1']
  %s0 = inlined_call_operand.vmem [shape: f32[32,16], index: 0, kind: input, shape index: {}]
  %s1 = inlined_call_operand.vmem [shape: f32[32,8], index: 1, kind: input, shape index: {}]
  %s2 = inlined_call_operand.vmem [shape: f32[8,256], index: 2, kind: input, shape index: {}]
  %s3 = inlined_call_operand.vmem [shape: f32[1,256], index: 3, kind: input, shape index: {}]
  %s4 = inlined_call_operand.vmem [shape: f32[256,8], index: 4, kind: input, shape index: {}]
  %s5 = inlined_call_operand.vmem [shape: f32[1,8], index: 5, kind: input, shape index: {}]
  %s6 = inlined_call_operand.vmem [shape: f32[16,128], index: 6, kind: input, shape index: {}]
  %s7 = inlined_call_operand.vmem [shape: f32[8,128], index: 7, kind: input, shape index: {}]
  %s8 = inlined_call_operand.vmem [shape: f32[128,128], index: 8, kind: input, shape index: {}]
  %s9 = inlined_call_operand.vmem [shape: f32[1,128], index: 9, kind: input, shape index: {}]
  %s10 = inlined_call_operand.hbm [shape: f32[3,128,128], index: 10, kind: input, shape index: {}]
  %s11 = inlined_call_operand.vmem [shape: f32[3,1,128], index: 11, kind: input, shape index: {}]
  %s12 = inlined_call_operand.vmem [shape: f32[1,128], index: 12, kind: input, shape index: {}]
  %s13 = inlined_call_operand.<no memory space> [shape: f32[1,1], index: 13, kind: input, shape index: {}]
  %s14 = inlined_call_operand.vmem [shape: f32[32,1], index: 14, kind: output, shape index: {}]
  %s15 = sld [smem:[#allocation0]]
  $region93: #{tpu_custom_call.1} parent=0
    _
  %s17 = ssub.s32 1, %s15
  %s18 = scalar_select 0, %s17, %s15
  %v19 = vstv %s13
  %20 = vst [vmem:[#allocation2] sm:$0x1] %v19
  $region1: #{tpu_custom_call.1} parent=0
    #allocation3 [shape = 'u8[196608]{0}', space=vmem, size = 0x30000, scoped, tag = 'input window, operand 10, single buffered']
    #allocation4 [shape = 's32[2]{0}', space=sflag, size = 0x8, scoped, tag = 'scoped memory for tpu_custom_call.1']
    %21 = vsyncpa [#allocation4], 0
    loop: start=0, step=1, limit=4
    $region2: #{tpu_custom_call.1} parent=1 // loop_pre_header
      _
    $region3: #{tpu_custom_call.1} parent=1 // loop_header
      %s23 = sphi 0, %s27
      %p24 = scmp.ge.s32.totalorder %s23, 4
      %s33 = sphi 0, %s35
      %s36 = sphi 0, %s33
      %s37 = sphi 0, %s36
      %s53 = sphi 0, %s37
      %s59 = sphi 0, %s61
      %s62 = sphi 0, %s59
      %s63 = sphi 0, %s62
      %s79 = sphi 0, %s63
      %s83 = sphi 0, %s83
      %s85 = sphi 0, %s83
      %s86 = sphi 0, %s85
      %s100 = sphi 0, %s86
      %s104 = sphi 0, %s104
      %s106 = sphi 0, %s104
      %s107 = sphi 0, %s106
      %s121 = sphi 0, %s107
      %s125 = sphi 0, %s125
      %s127 = sphi 0, %s125
      %s128 = sphi 0, %s127
      %s142 = sphi 0, %s128
      %s146 = sphi 0, %s146
      %s148 = sphi 0, %s146
      %s149 = sphi 0, %s148
      %s163 = sphi 0, %s149
      %s167 = sphi 0, %s167
      %s169 = sphi 0, %s167
      %s170 = sphi 0, %s169
      %s184 = sphi 0, %s170
      %s188 = sphi 0, %s188
      %s190 = sphi 0, %s188
      %s191 = sphi 0, %s190
      %s205 = sphi 0, %s191
      %s209 = sphi 0, %s209
      %s211 = sphi 0, %s209
      %s212 = sphi 0, %s211
      %s226 = sphi 0, %s212
      %s230 = sphi 0, %s230
      %s232 = sphi 0, %s230
      %s233 = sphi 0, %s232
      %s247 = sphi 0, %s233
      %s251 = sphi 0, %s251
      %s253 = sphi 0, %s251
      %s254 = sphi 0, %s253
      %s268 = sphi 0, %s254
      %s272 = sphi 0, %s272
      %s274 = sphi 0, %s272
      %s275 = sphi 0, %s274
      %s289 = sphi 0, %s275
      %s293 = sphi 0, %s293
      %s295 = sphi 0, %s293
      %s296 = sphi 0, %s295
      %s310 = sphi 0, %s296
      %s314 = sphi 0, %s314
      %s316 = sphi 0, %s314
      %s317 = sphi 0, %s316
      %s331 = sphi 0, %s317
      %s337 = sphi 0, %s339
      %s340 = sphi 0, %s337
      %s341 = sphi 0, %s340
      %s357 = sphi 0, %s341
    $region4: #{tpu_custom_call.1} parent=1 // loop_header_branch
      %26 = sbr.rel (%p24) target = $region8
    $region5: #{tpu_custom_call.1} parent=1 // loop_body
      %s28 = ssub.s32 %s23, 1
      %s29 = ssub.s32 %s23, 2
      %s30 = sadd.s32 %s23, 1
      %s31 = ssub.s32 %s23, %s30
      %p32 = scmp.eq.s32.totalorder %s31, 0
      %s34 = sadd.s32 %s33, 1
      %s35 = scalar_select %p32, %s33, %s34
      %p38 = pneg %p32
      %p39 = scmp.eq.s32.totalorder %s23, 1
      %p40 = por %p38, %p39
      %p41 = scmp.ne.s32.totalorder %s33, %s36
      %p42 = scmp.eq.s32.totalorder %s23, 0
      %p43 = por %p41, %p42
      %p44 = scmp.ne.s32.totalorder %s33, %s36
      %p45 = scmp.eq.s32.totalorder %s28, 1
      %p46 = por %p44, %p45
      %p47 = scmp.ne.s32.totalorder %s36, %s37
      %p48 = scmp.eq.s32.totalorder %s28, 0
      %p49 = por %p47, %p48
      %p50 = scmp.ne.s32.totalorder %s36, %s37
      %p51 = scmp.eq.s32.totalorder %s29, 1
      %p52 = por %p50, %p51
      %p54 = scmp.ne.s32.totalorder %s37, %s53
      %p55 = scmp.eq.s32.totalorder %s29, 0
      %p56 = por %p54, %p55
      %s57 = ssub.s32 %s23, %s30
      %p58 = scmp.eq.s32.totalorder %s57, 0
      %s60 = sadd.s32 %s59, 1
      %s61 = scalar_select %p58, %s59, %s60
      %p64 = pneg %p58
      %p65 = scmp.eq.s32.totalorder %s23, 1
      %p66 = por %p64, %p65
      %p67 = scmp.ne.s32.totalorder %s59, %s62
      %p68 = scmp.eq.s32.totalorder %s23, 0
      %p69 = por %p67, %p68
      %p70 = scmp.ne.s32.totalorder %s59, %s62
      %p71 = scmp.eq.s32.totalorder %s28, 1
      %p72 = por %p70, %p71
      %p73 = scmp.ne.s32.totalorder %s62, %s63
      %p74 = scmp.eq.s32.totalorder %s28, 0
      %p75 = por %p73, %p74
      %p76 = scmp.ne.s32.totalorder %s62, %s63
      %p77 = scmp.eq.s32.totalorder %s29, 1
      %p78 = por %p76, %p77
      %p80 = scmp.ne.s32.totalorder %s63, %s79
      %p81 = scmp.eq.s32.totalorder %s29, 0
      %p82 = por %p80, %p81
      %s84 = sadd.s32 %s83, 1
      %p87 = scmp.eq.s32.totalorder %s23, 1
      %p88 = scmp.ne.s32.totalorder %s83, %s85
      %p89 = scmp.eq.s32.totalorder %s23, 0
      %p90 = por %p88, %p89
      %p91 = scmp.ne.s32.totalorder %s83, %s85
      %p92 = scmp.eq.s32.totalorder %s28, 1
      %p93 = por %p91, %p92
      %p94 = scmp.ne.s32.totalorder %s85, %s86
      %p95 = scmp.eq.s32.totalorder %s28, 0
      %p96 = por %p94, %p95
      %p97 = scmp.ne.s32.totalorder %s85, %s86
      %p98 = scmp.eq.s32.totalorder %s29, 1
      %p99 = por %p97, %p98
      %p101 = scmp.ne.s32.totalorder %s86, %s100
      %p102 = scmp.eq.s32.totalorder %s29, 0
      %p103 = por %p101, %p102
      %s105 = sadd.s32 %s104, 1
      %p108 = scmp.eq.s32.totalorder %s23, 1
      %p109 = scmp.ne.s32.totalorder %s104, %s106
      %p110 = scmp.eq.s32.totalorder %s23, 0
      %p111 = por %p109, %p110
      %p112 = scmp.ne.s32.totalorder %s104, %s106
      %p113 = scmp.eq.s32.totalorder %s28, 1
      %p114 = por %p112, %p113
      %p115 = scmp.ne.s32.totalorder %s106, %s107
      %p116 = scmp.eq.s32.totalorder %s28, 0
      %p117 = por %p115, %p116
      %p118 = scmp.ne.s32.totalorder %s106, %s107
      %p119 = scmp.eq.s32.totalorder %s29, 1
      %p120 = por %p118, %p119
      %p122 = scmp.ne.s32.totalorder %s107, %s121
      %p123 = scmp.eq.s32.totalorder %s29, 0
      %p124 = por %p122, %p123
      %s126 = sadd.s32 %s125, 1
      %p129 = scmp.eq.s32.totalorder %s23, 1
      %p130 = scmp.ne.s32.totalorder %s125, %s127
      %p131 = scmp.eq.s32.totalorder %s23, 0
      %p132 = por %p130, %p131
      %p133 = scmp.ne.s32.totalorder %s125, %s127
      %p134 = scmp.eq.s32.totalorder %s28, 1
      %p135 = por %p133, %p134
      %p136 = scmp.ne.s32.totalorder %s127, %s128
      %p137 = scmp.eq.s32.totalorder %s28, 0
      %p138 = por %p136, %p137
      %p139 = scmp.ne.s32.totalorder %s127, %s128
      %p140 = scmp.eq.s32.totalorder %s29, 1
      %p141 = por %p139, %p140
      %p143 = scmp.ne.s32.totalorder %s128, %s142
      %p144 = scmp.eq.s32.totalorder %s29, 0
      %p145 = por %p143, %p144
      %s147 = sadd.s32 %s146, 1
      %p150 = scmp.eq.s32.totalorder %s23, 1
      %p151 = scmp.ne.s32.totalorder %s146, %s148
      %p152 = scmp.eq.s32.totalorder %s23, 0
      %p153 = por %p151, %p152
      %p154 = scmp.ne.s32.totalorder %s146, %s148
      %p155 = scmp.eq.s32.totalorder %s28, 1
      %p156 = por %p154, %p155
      %p157 = scmp.ne.s32.totalorder %s148, %s149
      %p158 = scmp.eq.s32.totalorder %s28, 0
      %p159 = por %p157, %p158
      %p160 = scmp.ne.s32.totalorder %s148, %s149
      %p161 = scmp.eq.s32.totalorder %s29, 1
      %p162 = por %p160, %p161
      %p164 = scmp.ne.s32.totalorder %s149, %s163
      %p165 = scmp.eq.s32.totalorder %s29, 0
      %p166 = por %p164, %p165
      %s168 = sadd.s32 %s167, 1
      %p171 = scmp.eq.s32.totalorder %s23, 1
      %p172 = scmp.ne.s32.totalorder %s167, %s169
      %p173 = scmp.eq.s32.totalorder %s23, 0
      %p174 = por %p172, %p173
      %p175 = scmp.ne.s32.totalorder %s167, %s169
      %p176 = scmp.eq.s32.totalorder %s28, 1
      %p177 = por %p175, %p176
      %p178 = scmp.ne.s32.totalorder %s169, %s170
      %p179 = scmp.eq.s32.totalorder %s28, 0
      %p180 = por %p178, %p179
      %p181 = scmp.ne.s32.totalorder %s169, %s170
      %p182 = scmp.eq.s32.totalorder %s29, 1
      %p183 = por %p181, %p182
      %p185 = scmp.ne.s32.totalorder %s170, %s184
      %p186 = scmp.eq.s32.totalorder %s29, 0
      %p187 = por %p185, %p186
      %s189 = sadd.s32 %s188, 1
      %p192 = scmp.eq.s32.totalorder %s23, 1
      %p193 = scmp.ne.s32.totalorder %s188, %s190
      %p194 = scmp.eq.s32.totalorder %s23, 0
      %p195 = por %p193, %p194
      %p196 = scmp.ne.s32.totalorder %s188, %s190
      %p197 = scmp.eq.s32.totalorder %s28, 1
      %p198 = por %p196, %p197
      %p199 = scmp.ne.s32.totalorder %s190, %s191
      %p200 = scmp.eq.s32.totalorder %s28, 0
      %p201 = por %p199, %p200
      %p202 = scmp.ne.s32.totalorder %s190, %s191
      %p203 = scmp.eq.s32.totalorder %s29, 1
      %p204 = por %p202, %p203
      %p206 = scmp.ne.s32.totalorder %s191, %s205
      %p207 = scmp.eq.s32.totalorder %s29, 0
      %p208 = por %p206, %p207
      %s210 = sadd.s32 %s209, 1
      %p213 = scmp.eq.s32.totalorder %s23, 1
      %p214 = scmp.ne.s32.totalorder %s209, %s211
      %p215 = scmp.eq.s32.totalorder %s23, 0
      %p216 = por %p214, %p215
      %p217 = scmp.ne.s32.totalorder %s209, %s211
      %p218 = scmp.eq.s32.totalorder %s28, 1
      %p219 = por %p217, %p218
      %p220 = scmp.ne.s32.totalorder %s211, %s212
      %p221 = scmp.eq.s32.totalorder %s28, 0
      %p222 = por %p220, %p221
      %p223 = scmp.ne.s32.totalorder %s211, %s212
      %p224 = scmp.eq.s32.totalorder %s29, 1
      %p225 = por %p223, %p224
      %p227 = scmp.ne.s32.totalorder %s212, %s226
      %p228 = scmp.eq.s32.totalorder %s29, 0
      %p229 = por %p227, %p228
      %s231 = sadd.s32 %s230, 1
      %p234 = scmp.eq.s32.totalorder %s23, 1
      %p235 = scmp.ne.s32.totalorder %s230, %s232
      %p236 = scmp.eq.s32.totalorder %s23, 0
      %p237 = por %p235, %p236
      %p238 = scmp.ne.s32.totalorder %s230, %s232
      %p239 = scmp.eq.s32.totalorder %s28, 1
      %p240 = por %p238, %p239
      %p241 = scmp.ne.s32.totalorder %s232, %s233
      %p242 = scmp.eq.s32.totalorder %s28, 0
      %p243 = por %p241, %p242
      %p244 = scmp.ne.s32.totalorder %s232, %s233
      %p245 = scmp.eq.s32.totalorder %s29, 1
      %p246 = por %p244, %p245
      %p248 = scmp.ne.s32.totalorder %s233, %s247
      %p249 = scmp.eq.s32.totalorder %s29, 0
      %p250 = por %p248, %p249
      %s252 = sadd.s32 %s251, 1
      %p255 = scmp.eq.s32.totalorder %s23, 1
      %p256 = scmp.ne.s32.totalorder %s251, %s253
      %p257 = scmp.eq.s32.totalorder %s23, 0
      %p258 = por %p256, %p257
      %p259 = scmp.ne.s32.totalorder %s251, %s253
      %p260 = scmp.eq.s32.totalorder %s28, 1
      %p261 = por %p259, %p260
      %p262 = scmp.ne.s32.totalorder %s253, %s254
      %p263 = scmp.eq.s32.totalorder %s28, 0
      %p264 = por %p262, %p263
      %p265 = scmp.ne.s32.totalorder %s253, %s254
      %p266 = scmp.eq.s32.totalorder %s29, 1
      %p267 = por %p265, %p266
      %p269 = scmp.ne.s32.totalorder %s254, %s268
      %p270 = scmp.eq.s32.totalorder %s29, 0
      %p271 = por %p269, %p270
      %s273 = sadd.s32 %s272, 1
      %p276 = scmp.eq.s32.totalorder %s23, 1
      %p277 = scmp.ne.s32.totalorder %s272, %s274
      %p278 = scmp.eq.s32.totalorder %s23, 0
      %p279 = por %p277, %p278
      %p280 = scmp.ne.s32.totalorder %s272, %s274
      %p281 = scmp.eq.s32.totalorder %s28, 1
      %p282 = por %p280, %p281
      %p283 = scmp.ne.s32.totalorder %s274, %s275
      %p284 = scmp.eq.s32.totalorder %s28, 0
      %p285 = por %p283, %p284
      %p286 = scmp.ne.s32.totalorder %s274, %s275
      %p287 = scmp.eq.s32.totalorder %s29, 1
      %p288 = por %p286, %p287
      %p290 = scmp.ne.s32.totalorder %s275, %s289
      %p291 = scmp.eq.s32.totalorder %s29, 0
      %p292 = por %p290, %p291
      %s294 = sadd.s32 %s293, 1
      %p297 = scmp.eq.s32.totalorder %s23, 1
      %p298 = scmp.ne.s32.totalorder %s293, %s295
      %p299 = scmp.eq.s32.totalorder %s23, 0
      %p300 = por %p298, %p299
      %p301 = scmp.ne.s32.totalorder %s293, %s295
      %p302 = scmp.eq.s32.totalorder %s28, 1
      %p303 = por %p301, %p302
      %p304 = scmp.ne.s32.totalorder %s295, %s296
      %p305 = scmp.eq.s32.totalorder %s28, 0
      %p306 = por %p304, %p305
      %p307 = scmp.ne.s32.totalorder %s295, %s296
      %p308 = scmp.eq.s32.totalorder %s29, 1
      %p309 = por %p307, %p308
      %p311 = scmp.ne.s32.totalorder %s296, %s310
      %p312 = scmp.eq.s32.totalorder %s29, 0
      %p313 = por %p311, %p312
      %s315 = sadd.s32 %s314, 1
      %p318 = scmp.eq.s32.totalorder %s23, 1
      %p319 = scmp.ne.s32.totalorder %s314, %s316
      %p320 = scmp.eq.s32.totalorder %s23, 0
      %p321 = por %p319, %p320
      %p322 = scmp.ne.s32.totalorder %s314, %s316
      %p323 = scmp.eq.s32.totalorder %s28, 1
      %p324 = por %p322, %p323
      %p325 = scmp.ne.s32.totalorder %s316, %s317
      %p326 = scmp.eq.s32.totalorder %s28, 0
      %p327 = por %p325, %p326
      %p328 = scmp.ne.s32.totalorder %s316, %s317
      %p329 = scmp.eq.s32.totalorder %s29, 1
      %p330 = por %p328, %p329
      %p332 = scmp.ne.s32.totalorder %s317, %s331
      %p333 = scmp.eq.s32.totalorder %s29, 0
      %p334 = por %p332, %p333
      %s335 = ssub.s32 %s23, %s30
      %p336 = scmp.eq.s32.totalorder %s335, 0
      %s338 = sadd.s32 %s337, 1
      %s339 = scalar_select %p336, %s337, %s338
      %p342 = pneg %p336
      %p343 = scmp.eq.s32.totalorder %s23, 1
      %p344 = por %p342, %p343
      %p345 = scmp.ne.s32.totalorder %s337, %s340
      %p346 = scmp.eq.s32.totalorder %s23, 0
      %p347 = por %p345, %p346
      %p348 = scmp.ne.s32.totalorder %s337, %s340
      %p349 = scmp.eq.s32.totalorder %s28, 1
      %p350 = por %p348, %p349
      %p351 = scmp.ne.s32.totalorder %s340, %s341
      %p352 = scmp.eq.s32.totalorder %s28, 0
      %p353 = por %p351, %p352
      %p354 = scmp.ne.s32.totalorder %s340, %s341
      %p355 = scmp.eq.s32.totalorder %s29, 1
      %p356 = por %p354, %p355
      %p358 = scmp.ne.s32.totalorder %s341, %s357
      %p359 = scmp.eq.s32.totalorder %s29, 0
      %p360 = por %p358, %p359
      %p361 = scmp.le.s32.totalorder 1, %s23
      %p362 = scmp.lt.s32.totalorder %s23, 3
      %p363 = pnand %p361, %p362
      %p364 = pneg %p363
      // Predicated region
      $region9: #{tpu_custom_call.1} parent=5 // pred_check
        _
      $region10: #{tpu_custom_call.1} parent=5 // pred_check_branch
        %366 = sbr.rel (%p363) target = $region12
      $region11: #{tpu_custom_call.1} parent=5 // pred_region
        %s367 = ssub.s32 %s23, 1
        // Predicated region
        $region13: #{tpu_custom_call.1} parent=11 // pred_check
          %p368 = pneg %p96
        $region14: #{tpu_custom_call.1} parent=11 // pred_check_branch
          %370 = sbr.rel (%p368) target = $region16
        $region15: #{tpu_custom_call.1} parent=11 // pred_region
          _
        $region16: #{tpu_custom_call.1} parent=11 // pred_fallthru
          _
        // Predicated region
        $region17: #{tpu_custom_call.1} parent=11 // pred_check
          %p371 = pneg %p117
        $region18: #{tpu_custom_call.1} parent=11 // pred_check_branch
          %373 = sbr.rel (%p371) target = $region20
        $region19: #{tpu_custom_call.1} parent=11 // pred_region
          _
        $region20: #{tpu_custom_call.1} parent=11 // pred_fallthru
          _
        // Predicated region
        $region21: #{tpu_custom_call.1} parent=11 // pred_check
          %p374 = pneg %p138
        $region22: #{tpu_custom_call.1} parent=11 // pred_check_branch
          %376 = sbr.rel (%p374) target = $region24
        $region23: #{tpu_custom_call.1} parent=11 // pred_region
          _
        $region24: #{tpu_custom_call.1} parent=11 // pred_fallthru
          _
        // Predicated region
        $region25: #{tpu_custom_call.1} parent=11 // pred_check
          %p377 = pneg %p159
        $region26: #{tpu_custom_call.1} parent=11 // pred_check_branch
          %379 = sbr.rel (%p377) target = $region28
        $region27: #{tpu_custom_call.1} parent=11 // pred_region
          _
        $region28: #{tpu_custom_call.1} parent=11 // pred_fallthru
          _
        // Predicated region
        $region29: #{tpu_custom_call.1} parent=11 // pred_check
          %p380 = pneg %p180
        $region30: #{tpu_custom_call.1} parent=11 // pred_check_branch
          %382 = sbr.rel (%p380) target = $region32
        $region31: #{tpu_custom_call.1} parent=11 // pred_region
          _
        $region32: #{tpu_custom_call.1} parent=11 // pred_fallthru
          _
        // Predicated region
        $region33: #{tpu_custom_call.1} parent=11 // pred_check
          %p383 = pneg %p201
        $region34: #{tpu_custom_call.1} parent=11 // pred_check_branch
          %385 = sbr.rel (%p383) target = $region36
        $region35: #{tpu_custom_call.1} parent=11 // pred_region
          _
        $region36: #{tpu_custom_call.1} parent=11 // pred_fallthru
          _
        // Predicated region
        $region37: #{tpu_custom_call.1} parent=11 // pred_check
          %p386 = pneg %p222
        $region38: #{tpu_custom_call.1} parent=11 // pred_check_branch
          %388 = sbr.rel (%p386) target = $region40
        $region39: #{tpu_custom_call.1} parent=11 // pred_region
          _
        $region40: #{tpu_custom_call.1} parent=11 // pred_fallthru
          _
        // Predicated region
        $region41: #{tpu_custom_call.1} parent=11 // pred_check
          %p389 = pneg %p243
        $region42: #{tpu_custom_call.1} parent=11 // pred_check_branch
          %391 = sbr.rel (%p389) target = $region44
        $region43: #{tpu_custom_call.1} parent=11 // pred_region
          _
        $region44: #{tpu_custom_call.1} parent=11 // pred_fallthru
          _
        // Predicated region
        $region45: #{tpu_custom_call.1} parent=11 // pred_check
          %p392 = pneg %p264
        $region46: #{tpu_custom_call.1} parent=11 // pred_check_branch
          %394 = sbr.rel (%p392) target = $region48
        $region47: #{tpu_custom_call.1} parent=11 // pred_region
          %396 = vsyncadd [#allocation4], 0
          %s397 = sshll.u32 %s10, 4
          %s398 = int_to_ptr.hbm [resolvable:$true] %s397
          %s399 = sshll.u32 [#allocation3], 4
          %s400 = int_to_ptr.vmem [resolvable:$true] %s399
          %405 = dma.hbm_to_vmem [thread:$0]  %s398, 6144, %s400, [#allocation4], 128, 128, 8
        $region48: #{tpu_custom_call.1} parent=11 // pred_fallthru
          _
        // Predicated region
        $region49: #{tpu_custom_call.1} parent=11 // pred_check
          %p406 = pneg %p285
        $region50: #{tpu_custom_call.1} parent=11 // pred_check_branch
          %408 = sbr.rel (%p406) target = $region52
        $region51: #{tpu_custom_call.1} parent=11 // pred_region
          _
        $region52: #{tpu_custom_call.1} parent=11 // pred_fallthru
          _
        // Predicated region
        $region53: #{tpu_custom_call.1} parent=11 // pred_check
          %p409 = pneg %p306
        $region54: #{tpu_custom_call.1} parent=11 // pred_check_branch
          %411 = sbr.rel (%p409) target = $region56
        $region55: #{tpu_custom_call.1} parent=11 // pred_region
          _
        $region56: #{tpu_custom_call.1} parent=11 // pred_fallthru
          _
        // Predicated region
        $region57: #{tpu_custom_call.1} parent=11 // pred_check
          %p412 = pneg %p327
        $region58: #{tpu_custom_call.1} parent=11 // pred_check_branch
          %414 = sbr.rel (%p412) target = $region60
        $region59: #{tpu_custom_call.1} parent=11 // pred_region
          _
        $region60: #{tpu_custom_call.1} parent=11 // pred_fallthru
          _
      $region12: #{tpu_custom_call.1} parent=5 // pred_fallthru
        _
      %p415 = scmp.lt.s32.totalorder %s23, 2
      // Predicated region
      $region61: #{tpu_custom_call.1} parent=5 // pred_check
        %p416 = pneg %p415
      $region62: #{tpu_custom_call.1} parent=5 // pred_check_branch
        %418 = sbr.rel (%p416) target = $region64
      $region63: #{tpu_custom_call.1} parent=5 // pred_region
        // Predicated region
        $region65: #{tpu_custom_call.1} parent=63 // pred_check
          %p419 = pneg %p43
        $region66: #{tpu_custom_call.1} parent=63 // pred_check_branch
          %421 = sbr.rel (%p419) target = $region68
        $region67: #{tpu_custom_call.1} parent=63 // pred_region
          %s422 = smul.u32 2, %s23
          %p423 = scmp.lt.s32.totalorder %s422, 3
          %s424 = scalar_select %p423, %s422, 3
          %s425 = smul.addr %s424, 8
          %s426 = scalar_lea.vmem %s0, %s425
          %s427 = smul.u32 2, %s23
        $region68: #{tpu_custom_call.1} parent=63 // pred_fallthru
          _
        // Predicated region
        $region69: #{tpu_custom_call.1} parent=63 // pred_check
          %p428 = pneg %p69
        $region70: #{tpu_custom_call.1} parent=63 // pred_check_branch
          %430 = sbr.rel (%p428) target = $region72
        $region71: #{tpu_custom_call.1} parent=63 // pred_region
          %s431 = smul.u32 2, %s23
          %p432 = scmp.lt.s32.totalorder %s431, 3
          %s433 = scalar_select %p432, %s431, 3
          %s434 = smul.addr %s433, 8
          %s435 = scalar_lea.vmem %s1, %s434
          %s436 = smul.u32 2, %s23
        $region72: #{tpu_custom_call.1} parent=63 // pred_fallthru
          _
      $region64: #{tpu_custom_call.1} parent=5 // pred_fallthru
        _
      %p437 = scmp.le.s32.totalorder 1, %s23
      %p438 = scmp.lt.s32.totalorder %s23, 3
      %p439 = pnand %p437, %p438
      %p440 = pneg %p439
      // Predicated region
      $region73: #{tpu_custom_call.1} parent=5 // pred_check
        _
      $region74: #{tpu_custom_call.1} parent=5 // pred_check_branch
        %442 = sbr.rel (%p439) target = $region76
      $region75: #{tpu_custom_call.1} parent=5 // pred_region
        %s443 = ssub.s32 %s23, 1
        // Predicated region
        $region77: #{tpu_custom_call.1} parent=75 // pred_check
          %p444 = pneg %p264
        $region78: #{tpu_custom_call.1} parent=75 // pred_check_branch
          %446 = sbr.rel (%p444) target = $region80
        $region79: #{tpu_custom_call.1} parent=75 // pred_region
          %448 = dma.done [#allocation4], 6144
        $region80: #{tpu_custom_call.1} parent=75 // pred_fallthru
          _
        %s449 = smul.u32 2, %s28
        %p450 = scmp.lt.s32.totalorder %s449, 3
        %s451 = scalar_select %p450, %s449, 3
        %s452 = smul.addr %s451, 8
        %s453 = scalar_lea.vmem %s0, %s452
        %p454 = pneg %p49
        %p455 = pneg %p46
        %s456 = smul.u32 2, %s28
        %p457 = scmp.lt.s32.totalorder %s456, 3
        %s458 = scalar_select %p457, %s456, 3
        %s459 = smul.addr %s458, 8
        %s460 = scalar_lea.vmem %s1, %s459
        %p461 = pneg %p75
        %p462 = pneg %p72
        %p463 = pneg %p96
        %p464 = pneg %p93
        %p465 = pneg %p117
        %p466 = pneg %p114
        %p467 = pneg %p138
        %p468 = pneg %p135
        %p469 = pneg %p159
        %p470 = pneg %p156
        %p471 = pneg %p180
        %p472 = pneg %p177
        %p473 = pneg %p201
        %p474 = pneg %p198
        %p475 = pneg %p222
        %p476 = pneg %p219
        %p477 = pneg %p243
        %p478 = pneg %p240
        %p479 = pneg %p264
        %p480 = pneg %p261
        %p481 = pneg %p285
        %p482 = pneg %p282
        %p483 = pneg %p306
        %p484 = pneg %p303
        %p485 = pneg %p327
        %p486 = pneg %p324
        %p487 = pneg %p353
        %p488 = pneg %p350
        %s489 = smul.u32 2, %s28
        %p490 = scmp.lt.s32.totalorder %s489, 3
        %s491 = scalar_select %p490, %s489, 3
        %s492 = smul.addr %s491, 8
        %s493 = scalar_lea.vmem %s14, %s492
        %s494 = smul.u32 2, %s28
        %p495 = scmp.lt.s32.totalorder %s494, 3
        %s496 = scalar_select %p495, %s494, 3
        %s497 = smul.addr %s496, 8
        %s498 = scalar_lea.vmem %s0, %s497
        %s499 = smul.u32 2, %s28
        %s500 = smul.u32 2, %s28
        %p501 = scmp.lt.s32.totalorder %s500, 3
        %s502 = scalar_select %p501, %s500, 3
        %s503 = smul.addr %s502, 8
        %s504 = scalar_lea.vmem %s1, %s503
        %s505 = smul.u32 2, %s28
        %s506 = smul.u32 2, %s28
        %p507 = scmp.lt.s32.totalorder %s506, 3
        %s508 = scalar_select %p507, %s506, 3
        %s509 = smul.addr %s508, 8
        %s510 = scalar_lea.vmem %s14, %s509
        %s511 = smul.u32 2, %s28
        %v512 = vld [vmem:[%s498] sm:$0xff]
        %v513 = vld [vmem:[%s498 + $0x8] sm:$0xff]
        %v514 = vld [vmem:[%s504] sm:$0xff]
        %v515 = vld [vmem:[%s504 + $0x8] sm:$0xff]
        %v516 = vld [vmem:[%s2] sm:$0xff]
        %v517 = vld [vmem:[%s2 + $0x8] sm:$0xff]
        %v518 = vld [vmem:[%s3] sm:$0x3]
        %v520 = vperm.slane %v518, 0
        %v521 = vperm.slane %v518, 1
        %vm524 = vcmask 64512
        %v526 = vsel %vm524, %v514, 0
        %v529 = vsel %vm524, %v515, 0
        %531 = vmatpush.msra.mxu0 0.0
        %532 = vmatpush.msra.mxu0 0.0
        %533 = vmatpush.msra.mxu0 0.0
        %534 = vmatpush.msra.mxu0 0.0
        %535 = vmatpush.msra.mxu0 0.0
        %536 = vmatpush.msra.mxu0 0.0
        %537 = vmatpush.msra.mxu0 0.0
        %538 = vmatpush.msra.mxu0 0.0
        %539 = vmatpush.msra.mxu0 0.0
        %540 = vmatpush.msra.mxu0 0.0
        %541 = vmatpush.msra.mxu0 0.0
        %542 = vmatpush.msra.mxu0 0.0
        %543 = vmatpush.msra.mxu0 0.0
        %544 = vmatpush.msra.mxu0 0.0
        %545 = vmatpush.msra.mxu0 0.0
        %546 = vmatpush.msra.mxu0 %v516
        %547 = vmatmul.f32.gmra.mxu0 %v526
        %v548 = vpop.f32.mrf.mxu0
        %v549 = vadd.f32 %v520, %v548
        %550 = vmatmul.f32.gmra.mxu0 %v529
        %v551 = vpop.f32.mrf.mxu0
        %v552 = vadd.f32 %v520, %v551
        %553 = vdwg.mxu0
        %554 = vmatpush.msra.mxu0 0.0
        %555 = vmatpush.msra.mxu0 0.0
        %556 = vmatpush.msra.mxu0 0.0
        %557 = vmatpush.msra.mxu0 0.0
        %558 = vmatpush.msra.mxu0 0.0
        %559 = vmatpush.msra.mxu0 0.0
        %560 = vmatpush.msra.mxu0 0.0
        %561 = vmatpush.msra.mxu0 0.0
        %562 = vmatpush.msra.mxu0 0.0
        %563 = vmatpush.msra.mxu0 0.0
        %564 = vmatpush.msra.mxu0 0.0
        %565 = vmatpush.msra.mxu0 0.0
        %566 = vmatpush.msra.mxu0 0.0
        %567 = vmatpush.msra.mxu0 0.0
        %568 = vmatpush.msra.mxu0 0.0
        %569 = vmatpush.msra.mxu0 %v517
        %570 = vmatmul.f32.gmra.mxu0 %v526
        %v571 = vpop.f32.mrf.mxu0
        %v572 = vadd.f32 %v521, %v571
        %573 = vmatmul.f32.gmra.mxu0 %v529
        %v574 = vpop.f32.mrf.mxu0
        %v575 = vadd.f32 %v521, %v574
        %576 = vdwg.mxu0
        %v577 = vmax.f32 %v549, 0.0
        %v578 = vmax.f32 %v572, 0.0
        %v579 = vmax.f32 %v552, 0.0
        %v580 = vmax.f32 %v575, 0.0
        %v581 = vld [vmem:[%s4] sm:$0xff]
        %v582 = vld [vmem:[%s4 + $0x8] sm:$0xff]
        %v583 = vld [vmem:[%s4 + $0x10] sm:$0xff]
        %v584 = vld [vmem:[%s4 + $0x18] sm:$0xff]
        %v585 = vld [vmem:[%s4 + $0x20] sm:$0xff]
        %v586 = vld [vmem:[%s4 + $0x28] sm:$0xff]
        %v587 = vld [vmem:[%s4 + $0x30] sm:$0xff]
        %v588 = vld [vmem:[%s4 + $0x38] sm:$0xff]
        %v589 = vld [vmem:[%s4 + $0x40] sm:$0xff]
        %v590 = vld [vmem:[%s4 + $0x48] sm:$0xff]
        %v591 = vld [vmem:[%s4 + $0x50] sm:$0xff]
        %v592 = vld [vmem:[%s4 + $0x58] sm:$0xff]
        %v593 = vld [vmem:[%s4 + $0x60] sm:$0xff]
        %v594 = vld [vmem:[%s4 + $0x68] sm:$0xff]
        %v595 = vld [vmem:[%s4 + $0x70] sm:$0xff]
        %v596 = vld [vmem:[%s4 + $0x78] sm:$0xff]
        %v597 = vld [vmem:[%s4 + $0x80] sm:$0xff]
        %v598 = vld [vmem:[%s4 + $0x88] sm:$0xff]
        %v599 = vld [vmem:[%s4 + $0x90] sm:$0xff]
        %v600 = vld [vmem:[%s4 + $0x98] sm:$0xff]
        %v601 = vld [vmem:[%s4 + $0xa0] sm:$0xff]
        %v602 = vld [vmem:[%s4 + $0xa8] sm:$0xff]
        %v603 = vld [vmem:[%s4 + $0xb0] sm:$0xff]
        %v604 = vld [vmem:[%s4 + $0xb8] sm:$0xff]
        %v605 = vld [vmem:[%s4 + $0xc0] sm:$0xff]
        %v606 = vld [vmem:[%s4 + $0xc8] sm:$0xff]
        %v607 = vld [vmem:[%s4 + $0xd0] sm:$0xff]
        %v608 = vld [vmem:[%s4 + $0xd8] sm:$0xff]
        %v609 = vld [vmem:[%s4 + $0xe0] sm:$0xff]
        %v610 = vld [vmem:[%s4 + $0xe8] sm:$0xff]
        %v611 = vld [vmem:[%s4 + $0xf0] sm:$0xff]
        %v612 = vld [vmem:[%s4 + $0xf8] sm:$0xff]
        %v613 = vld [vmem:[%s5] sm:$0x1]
        %v615 = vperm.slane %v613, 0
        %617 = vmatpush.msra.mxu0 %v596
        %618 = vmatpush.msra.mxu0 %v595
        %619 = vmatpush.msra.mxu0 %v594
        %620 = vmatpush.msra.mxu0 %v593
        %621 = vmatpush.msra.mxu0 %v592
        %622 = vmatpush.msra.mxu0 %v591
        %623 = vmatpush.msra.mxu0 %v590
        %624 = vmatpush.msra.mxu0 %v589
        %625 = vmatpush.msra.mxu0 %v588
        %626 = vmatpush.msra.mxu0 %v587
        %627 = vmatpush.msra.mxu0 %v586
        %628 = vmatpush.msra.mxu0 %v585
        %629 = vmatpush.msra.mxu0 %v584
        %630 = vmatpush.msra.mxu0 %v583
        %631 = vmatpush.msra.mxu0 %v582
        %632 = vmatpush.msra.mxu0 %v581
        %633 = vmatmul.f32.gmra.mxu0 %v577
        %v634 = vpop.f32.mrf.mxu0
        %v635 = vadd.f32 %v615, %v634
        %636 = vmatmul.f32.gmra.mxu0 %v579
        %v637 = vpop.f32.mrf.mxu0
        %v638 = vadd.f32 %v615, %v637
        %639 = vdwg.mxu0
        %640 = vmatpush.msra.mxu0 %v612
        %641 = vmatpush.msra.mxu0 %v611
        %642 = vmatpush.msra.mxu0 %v610
        %643 = vmatpush.msra.mxu0 %v609
        %644 = vmatpush.msra.mxu0 %v608
        %645 = vmatpush.msra.mxu0 %v607
        %646 = vmatpush.msra.mxu0 %v606
        %647 = vmatpush.msra.mxu0 %v605
        %648 = vmatpush.msra.mxu0 %v604
        %649 = vmatpush.msra.mxu0 %v603
        %650 = vmatpush.msra.mxu0 %v602
        %651 = vmatpush.msra.mxu0 %v601
        %652 = vmatpush.msra.mxu0 %v600
        %653 = vmatpush.msra.mxu0 %v599
        %654 = vmatpush.msra.mxu0 %v598
        %655 = vmatpush.msra.mxu0 %v597
        %656 = vmatmul.f32.gmra.mxu0 %v578
        %v657 = vpop.f32.mrf.mxu0
        %v658 = vadd.f32 %v635, %v657
        %659 = vmatmul.f32.gmra.mxu0 %v580
        %v660 = vpop.f32.mrf.mxu0
        %v661 = vadd.f32 %v638, %v660
        %662 = vdwg.mxu0
        %v663 = vmax.f32 %v658, 0.0
        %v664 = vmax.f32 %v661, 0.0
        %v665 = vadd.f32 %v663, %v514
        %v666 = vadd.f32 %v664, %v515
        %v667 = vld [vmem:[%s6] sm:$0xff]
        %v668 = vld [vmem:[%s6 + $0x8] sm:$0xff]
        %vm669 = vcmask 130048
        %v671 = vsel %vm669, %v512, 0
        %v674 = vsel %vm669, %v513, 0
        %676 = vmatpush.msra.mxu0 0.0
        %677 = vmatpush.msra.mxu0 0.0
        %678 = vmatpush.msra.mxu0 0.0
        %679 = vmatpush.msra.mxu0 0.0
        %680 = vmatpush.msra.mxu0 0.0
        %681 = vmatpush.msra.mxu0 0.0
        %682 = vmatpush.msra.mxu0 0.0
        %683 = vmatpush.msra.mxu0 0.0
        %684 = vmatpush.msra.mxu0 0.0
        %685 = vmatpush.msra.mxu0 0.0
        %686 = vmatpush.msra.mxu0 0.0
        %687 = vmatpush.msra.mxu0 0.0
        %688 = vmatpush.msra.mxu0 0.0
        %689 = vmatpush.msra.mxu0 0.0
        %690 = vmatpush.msra.mxu0 %v668
        %691 = vmatpush.msra.mxu0 %v667
        %692 = vmatmul.f32.gmra.mxu0 %v671
        %v693 = vpop.f32.mrf.mxu0
        %v694 = vadd.f32 0.0, %v693
        %695 = vmatmul.f32.gmra.mxu0 %v674
        %v696 = vpop.f32.mrf.mxu0
        %v697 = vadd.f32 0.0, %v696
        %698 = vdwg.mxu0
        %v699 = vld [vmem:[%s7] sm:$0xff]
        %v701 = vsel %vm524, %v665, 0
        %v704 = vsel %vm524, %v666, 0
        %706 = vmatpush.msra.mxu0 0.0
        %707 = vmatpush.msra.mxu0 0.0
        %708 = vmatpush.msra.mxu0 0.0
        %709 = vmatpush.msra.mxu0 0.0
        %710 = vmatpush.msra.mxu0 0.0
        %711 = vmatpush.msra.mxu0 0.0
        %712 = vmatpush.msra.mxu0 0.0
        %713 = vmatpush.msra.mxu0 0.0
        %714 = vmatpush.msra.mxu0 0.0
        %715 = vmatpush.msra.mxu0 0.0
        %716 = vmatpush.msra.mxu0 0.0
        %717 = vmatpush.msra.mxu0 0.0
        %718 = vmatpush.msra.mxu0 0.0
        %719 = vmatpush.msra.mxu0 0.0
        %720 = vmatpush.msra.mxu0 0.0
        %721 = vmatpush.msra.mxu0 %v699
        %722 = vmatmul.f32.gmra.mxu0 %v701
        %v723 = vpop.f32.mrf.mxu0
        %v724 = vadd.f32 0.0, %v723
        %725 = vmatmul.f32.gmra.mxu0 %v704
        %v726 = vpop.f32.mrf.mxu0
        %v727 = vadd.f32 0.0, %v726
        %728 = vdwg.mxu0
        %v729 = vmul.f32 %v694, %v724
        %v730 = vmul.f32 %v697, %v727
        %v731 = vld [vmem:[%s8] sm:$0xff]
        %v732 = vld [vmem:[%s8 + $0x8] sm:$0xff]
        %v733 = vld [vmem:[%s8 + $0x10] sm:$0xff]
        %v734 = vld [vmem:[%s8 + $0x18] sm:$0xff]
        %v735 = vld [vmem:[%s8 + $0x20] sm:$0xff]
        %v736 = vld [vmem:[%s8 + $0x28] sm:$0xff]
        %v737 = vld [vmem:[%s8 + $0x30] sm:$0xff]
        %v738 = vld [vmem:[%s8 + $0x38] sm:$0xff]
        %v739 = vld [vmem:[%s8 + $0x40] sm:$0xff]
        %v740 = vld [vmem:[%s8 + $0x48] sm:$0xff]
        %v741 = vld [vmem:[%s8 + $0x50] sm:$0xff]
        %v742 = vld [vmem:[%s8 + $0x58] sm:$0xff]
        %v743 = vld [vmem:[%s8 + $0x60] sm:$0xff]
        %v744 = vld [vmem:[%s8 + $0x68] sm:$0xff]
        %v745 = vld [vmem:[%s8 + $0x70] sm:$0xff]
        %v746 = vld [vmem:[%s8 + $0x78] sm:$0xff]
        %v747 = vld [vmem:[%s9] sm:$0x1]
        %v749 = vperm.slane %v747, 0
        %751 = vmatpush.msra.mxu0 %v746
        %752 = vmatpush.msra.mxu0 %v745
        %753 = vmatpush.msra.mxu0 %v744
        %754 = vmatpush.msra.mxu0 %v743
        %755 = vmatpush.msra.mxu0 %v742
        %756 = vmatpush.msra.mxu0 %v741
        %757 = vmatpush.msra.mxu0 %v740
        %758 = vmatpush.msra.mxu0 %v739
        %759 = vmatpush.msra.mxu0 %v738
        %760 = vmatpush.msra.mxu0 %v737
        %761 = vmatpush.msra.mxu0 %v736
        %762 = vmatpush.msra.mxu0 %v735
        %763 = vmatpush.msra.mxu0 %v734
        %764 = vmatpush.msra.mxu0 %v733
        %765 = vmatpush.msra.mxu0 %v732
        %766 = vmatpush.msra.mxu0 %v731
        %767 = vmatmul.f32.gmra.mxu0 %v729
        %v768 = vpop.f32.mrf.mxu0
        %v769 = vadd.f32 %v749, %v768
        %770 = vmatmul.f32.gmra.mxu0 %v730
        %v771 = vpop.f32.mrf.mxu0
        %v772 = vadd.f32 %v749, %v771
        %773 = vdwg.mxu0
        %v774 = vmax.f32 %v769, 0.0
        %v775 = vmax.f32 %v772, 0.0
        %v776 = vld [vmem:[#allocation3] sm:$0xff]
        %v777 = vld [vmem:[#allocation3 + $0x8] sm:$0xff]
        %v778 = vld [vmem:[#allocation3 + $0x10] sm:$0xff]
        %v779 = vld [vmem:[#allocation3 + $0x18] sm:$0xff]
        %v780 = vld [vmem:[#allocation3 + $0x20] sm:$0xff]
        %v781 = vld [vmem:[#allocation3 + $0x28] sm:$0xff]
        %v782 = vld [vmem:[#allocation3 + $0x30] sm:$0xff]
        %v783 = vld [vmem:[#allocation3 + $0x38] sm:$0xff]
        %v784 = vld [vmem:[#allocation3 + $0x40] sm:$0xff]
        %v785 = vld [vmem:[#allocation3 + $0x48] sm:$0xff]
        %v786 = vld [vmem:[#allocation3 + $0x50] sm:$0xff]
        %v787 = vld [vmem:[#allocation3 + $0x58] sm:$0xff]
        %v788 = vld [vmem:[#allocation3 + $0x60] sm:$0xff]
        %v789 = vld [vmem:[#allocation3 + $0x68] sm:$0xff]
        %v790 = vld [vmem:[#allocation3 + $0x70] sm:$0xff]
        %v791 = vld [vmem:[#allocation3 + $0x78] sm:$0xff]
        %v792 = vld [vmem:[%s11] sm:$0x1]
        %v794 = vperm.slane %v792, 0
        %796 = vmatpush.msra.mxu0 %v791
        %797 = vmatpush.msra.mxu0 %v790
        %798 = vmatpush.msra.mxu0 %v789
        %799 = vmatpush.msra.mxu0 %v788
        %800 = vmatpush.msra.mxu0 %v787
        %801 = vmatpush.msra.mxu0 %v786
        %802 = vmatpush.msra.mxu0 %v785
        %803 = vmatpush.msra.mxu0 %v784
        %804 = vmatpush.msra.mxu0 %v783
        %805 = vmatpush.msra.mxu0 %v782
        %806 = vmatpush.msra.mxu0 %v781
        %807 = vmatpush.msra.mxu0 %v780
        %808 = vmatpush.msra.mxu0 %v779
        %809 = vmatpush.msra.mxu0 %v778
        %810 = vmatpush.msra.mxu0 %v777
        %811 = vmatpush.msra.mxu0 %v776
        %812 = vmatmul.f32.gmra.mxu0 %v774
        %v813 = vpop.f32.mrf.mxu0
        %v814 = vadd.f32 %v794, %v813
        %815 = vmatmul.f32.gmra.mxu0 %v775
        %v816 = vpop.f32.mrf.mxu0
        %v817 = vadd.f32 %v794, %v816
        %818 = vdwg.mxu0
        %v819 = vmax.f32 %v814, 0.0
        %v820 = vmax.f32 %v817, 0.0
        %s821 = scalar_lea.vmem [#allocation3], 128
        %v822 = vld [vmem:[%s821] sm:$0xff]
        %v823 = vld [vmem:[%s821 + $0x8] sm:$0xff]
        %v824 = vld [vmem:[%s821 + $0x10] sm:$0xff]
        %v825 = vld [vmem:[%s821 + $0x18] sm:$0xff]
        %v826 = vld [vmem:[%s821 + $0x20] sm:$0xff]
        %v827 = vld [vmem:[%s821 + $0x28] sm:$0xff]
        %v828 = vld [vmem:[%s821 + $0x30] sm:$0xff]
        %v829 = vld [vmem:[%s821 + $0x38] sm:$0xff]
        %v830 = vld [vmem:[%s821 + $0x40] sm:$0xff]
        %v831 = vld [vmem:[%s821 + $0x48] sm:$0xff]
        %v832 = vld [vmem:[%s821 + $0x50] sm:$0xff]
        %v833 = vld [vmem:[%s821 + $0x58] sm:$0xff]
        %v834 = vld [vmem:[%s821 + $0x60] sm:$0xff]
        %v835 = vld [vmem:[%s821 + $0x68] sm:$0xff]
        %v836 = vld [vmem:[%s821 + $0x70] sm:$0xff]
        %v837 = vld [vmem:[%s821 + $0x78] sm:$0xff]
        %s838 = scalar_lea.vmem %s11, 1
        %v839 = vld [vmem:[%s838] sm:$0x1]
        %v841 = vperm.slane %v839, 0
        %843 = vmatpush.msra.mxu0 %v837
        %844 = vmatpush.msra.mxu0 %v836
        %845 = vmatpush.msra.mxu0 %v835
        %846 = vmatpush.msra.mxu0 %v834
        %847 = vmatpush.msra.mxu0 %v833
        %848 = vmatpush.msra.mxu0 %v832
        %849 = vmatpush.msra.mxu0 %v831
        %850 = vmatpush.msra.mxu0 %v830
        %851 = vmatpush.msra.mxu0 %v829
        %852 = vmatpush.msra.mxu0 %v828
        %853 = vmatpush.msra.mxu0 %v827
        %854 = vmatpush.msra.mxu0 %v826
        %855 = vmatpush.msra.mxu0 %v825
        %856 = vmatpush.msra.mxu0 %v824
        %857 = vmatpush.msra.mxu0 %v823
        %858 = vmatpush.msra.mxu0 %v822
        %859 = vmatmul.f32.gmra.mxu0 %v819
        %v860 = vpop.f32.mrf.mxu0
        %v861 = vadd.f32 %v841, %v860
        %862 = vmatmul.f32.gmra.mxu0 %v820
        %v863 = vpop.f32.mrf.mxu0
        %v864 = vadd.f32 %v841, %v863
        %865 = vdwg.mxu0
        %v866 = vmax.f32 %v861, 0.0
        %v867 = vmax.f32 %v864, 0.0
        %s868 = scalar_lea.vmem [#allocation3], 256
        %v869 = vld [vmem:[%s868] sm:$0xff]
        %v870 = vld [vmem:[%s868 + $0x8] sm:$0xff]
        %v871 = vld [vmem:[%s868 + $0x10] sm:$0xff]
        %v872 = vld [vmem:[%s868 + $0x18] sm:$0xff]
        %v873 = vld [vmem:[%s868 + $0x20] sm:$0xff]
        %v874 = vld [vmem:[%s868 + $0x28] sm:$0xff]
        %v875 = vld [vmem:[%s868 + $0x30] sm:$0xff]
        %v876 = vld [vmem:[%s868 + $0x38] sm:$0xff]
        %v877 = vld [vmem:[%s868 + $0x40] sm:$0xff]
        %v878 = vld [vmem:[%s868 + $0x48] sm:$0xff]
        %v879 = vld [vmem:[%s868 + $0x50] sm:$0xff]
        %v880 = vld [vmem:[%s868 + $0x58] sm:$0xff]
        %v881 = vld [vmem:[%s868 + $0x60] sm:$0xff]
        %v882 = vld [vmem:[%s868 + $0x68] sm:$0xff]
        %v883 = vld [vmem:[%s868 + $0x70] sm:$0xff]
        %v884 = vld [vmem:[%s868 + $0x78] sm:$0xff]
        %s885 = scalar_lea.vmem %s11, 2
        %v886 = vld [vmem:[%s885] sm:$0x1]
        %v888 = vperm.slane %v886, 0
        %890 = vmatpush.msra.mxu0 %v884
        %891 = vmatpush.msra.mxu0 %v883
        %892 = vmatpush.msra.mxu0 %v882
        %893 = vmatpush.msra.mxu0 %v881
        %894 = vmatpush.msra.mxu0 %v880
        %895 = vmatpush.msra.mxu0 %v879
        %896 = vmatpush.msra.mxu0 %v878
        %897 = vmatpush.msra.mxu0 %v877
        %898 = vmatpush.msra.mxu0 %v876
        %899 = vmatpush.msra.mxu0 %v875
        %900 = vmatpush.msra.mxu0 %v874
        %901 = vmatpush.msra.mxu0 %v873
        %902 = vmatpush.msra.mxu0 %v872
        %903 = vmatpush.msra.mxu0 %v871
        %904 = vmatpush.msra.mxu0 %v870
        %905 = vmatpush.msra.mxu0 %v869
        %906 = vmatmul.f32.gmra.mxu0 %v866
        %v907 = vpop.f32.mrf.mxu0
        %v908 = vadd.f32 %v888, %v907
        %909 = vmatmul.f32.gmra.mxu0 %v867
        %v910 = vpop.f32.mrf.mxu0
        %v911 = vadd.f32 %v888, %v910
        %912 = vdwg.mxu0
        %v913 = vmax.f32 %v908, 0.0
        %v914 = vmax.f32 %v911, 0.0
        %v915 = vld [vmem:[%s12] sm:$0x1]
        %v917 = vperm.slane %v915, 0
        %v919 = vmul.f32 %v913, %v917
        %v920 = vmul.f32 %v914, %v917
        %921 = vadd.xlane.f32.xlu0 %v919
        %v922 = vpop.xlane.xlu0 %921
        %923 = vadd.xlane.f32.xlu0 %v920
        %v924 = vpop.xlane.xlu0 %923
        %v925 = vld [vmem:[#allocation2] sm:$0x1]
        %v927 = vperm.slane %v925, 0
        %v929 = vadd.f32 %v922, %v927
        %v930 = vadd.f32 %v924, %v927
        %v931 = vtanh.pop %v929
        %v932 = vtanh.pop %v930
        %vm933 = vcmask 7168
        %934 = vst.msk [vmem:[%s510] sm:$0xff] %vm933, %v931
        %935 = vst.msk [vmem:[%s510 + $0x8] sm:$0xff] %vm933, %v932
        %s936 = smul.u32 2, %s28
        %p937 = scmp.lt.s32.totalorder %s936, 3
        %s938 = scalar_select %p937, %s936, 3
        %s939 = smul.addr %s938, 8
        %s940 = scalar_lea.vmem %s14, %s939
        // Predicated region
        $region81: #{tpu_custom_call.1} parent=75 // pred_check
          %p941 = pneg %p350
        $region82: #{tpu_custom_call.1} parent=75 // pred_check_branch
          %943 = sbr.rel (%p941) target = $region84
        $region83: #{tpu_custom_call.1} parent=75 // pred_region
          %s944 = smul.u32 2, %s28
        $region84: #{tpu_custom_call.1} parent=75 // pred_fallthru
          _
      $region76: #{tpu_custom_call.1} parent=5 // pred_fallthru
        _
      %p945 = scmp.le.s32.totalorder 2, %s23
      // Predicated region
      $region85: #{tpu_custom_call.1} parent=5 // pred_check
        %p946 = pneg %p945
      $region86: #{tpu_custom_call.1} parent=5 // pred_check_branch
        %948 = sbr.rel (%p946) target = $region88
      $region87: #{tpu_custom_call.1} parent=5 // pred_region
        %s949 = ssub.s32 %s23, 2
        // Predicated region
        $region89: #{tpu_custom_call.1} parent=87 // pred_check
          %p950 = pneg %p356
        $region90: #{tpu_custom_call.1} parent=87 // pred_check_branch
          %952 = sbr.rel (%p950) target = $region92
        $region91: #{tpu_custom_call.1} parent=87 // pred_region
          %s953 = smul.u32 2, %s29
          %p954 = scmp.lt.s32.totalorder %s953, 3
          %s955 = scalar_select %p954, %s953, 3
          %s956 = smul.addr %s955, 8
          %s957 = scalar_lea.vmem %s14, %s956
        $region92: #{tpu_custom_call.1} parent=87 // pred_fallthru
          _
      $region88: #{tpu_custom_call.1} parent=5 // pred_fallthru
        _
    $region6: #{tpu_custom_call.1} parent=1 // loop_footer
      %s27 = sadd.s32 1, %s23
    $region7: #{tpu_custom_call.1} parent=1 // loop_footer_branch
      %22 = sbr.rel target = $region3
    $region8: #{tpu_custom_call.1} parent=1 // loop_exit
      _
    %958 = vsyncpa [#allocation4], 1
    %s959 = scalar_lea.sflag [#allocation4], 1
    %960 = vsyncpa %s959, 1

</llo_original>
